<compile_context>
chip_gen: v7x
topology: tpu7x:2x2x1
jax: 0.10.0
libtpu: 0.0.40
codegen_flags: <defaults>
</compile_context>

<pallas_src>
import math

import jax
import jax.numpy as jnp
from jax.experimental import pallas as pl
from jax.experimental.pallas import tpu as pltpu


HEAD_PAD = 128  # fused FD(1) + KParams(3) head, lane-padded to a full vreg width


# ----------------------------------------------------------------------------
# Pallas kernel: full FDI forward for one batch tile
# ----------------------------------------------------------------------------
def fdi_kernel(x_ref, w1_ref, b1_ref, w2_ref, b2_ref, wh_ref, bh_ref, out_ref):
    # Layer 1: tanh(x @ W1 + b1)   — x, W1 are bf16, accumulation in f32.
    h1 = jnp.tanh(
        jnp.dot(x_ref[...], w1_ref[...], preferred_element_type=jnp.float32)
        + b1_ref[...]
    )                                                                  # [Bt, 64] f32
    # Layer 2: tanh(h1 @ W2 + b2)
    h2 = jnp.tanh(
        jnp.dot(h1.astype(jnp.bfloat16), w2_ref[...],
                preferred_element_type=jnp.float32)
        + b2_ref[...]
    )                                                                  # [Bt, 64] f32
    # Fused heads (lane-padded to 128):
    #   column 0      = FD       (no activation)
    #   columns 1..3  = KParams  (tanh)
    #   columns 4..   = zero padding (tanh(0) == 0, harmless)
    heads = (
        jnp.dot(h2.astype(jnp.bfloat16), wh_ref[...],
                preferred_element_type=jnp.float32)
        + bh_ref[...]
    )                                                                  # [Bt, 128] f32
    col = jax.lax.broadcasted_iota(jnp.int32, heads.shape, 1)
    out_ref[...] = jnp.where(col == 0, heads, jnp.tanh(heads))


# ----------------------------------------------------------------------------
# Wrapper: batch-tiled pallas_call
# ----------------------------------------------------------------------------
def _round_up(x, m):
    return ((x + m - 1) // m) * m


def fdi_forward(state, action, params, *, b_tile=2048):
    """state: [B, obs_dim], action: [B, act_dim] (f32).
    Returns (FD [B, 1], KParams [B, 3]) in f32."""
    (w1, b1, w2, b2, wh, bh) = params
    B, obs_dim = state.shape
    act_dim = action.shape[1]
    d_in = obs_dim + act_dim
    assert w1.shape == (d_in, 64)

    # Concatenate once in the wrapper (single K=d_in matmul in the kernel) and
    # cast to bf16 (native MXU rate, halves input HBM bytes).
    x = jnp.concatenate([state, action], axis=-1).astype(jnp.bfloat16)

    # Tile selection: big tiles amortize per-step overhead, but keep >= 2 grid
    # steps when possible so the "parallel" axis can shard across both v7x TCs.
    # Multiple of 16 keeps bf16 (16,128) sublane tiling happy.
    bt = min(b_tile, max(16, _round_up((B + 1) // 2, 16)))
    num_tiles = -(-B // bt)               # ceil div
    b_pad = num_tiles * bt
    if b_pad != B:
        x = jnp.pad(x, ((0, b_pad - B), (0, 0)))

    const = lambda i: (0, 0)   # weights/biases: same (full) block every step

    cost = pl.CostEstimate(
        flops=2 * b_pad * 64 * (d_in + 64 + HEAD_PAD),
        transcendentals=b_pad * (64 + 64 + 3),
        bytes_accessed=(b_pad * (d_in * 2 + HEAD_PAD * 4)
                        + (d_in * 64 + 64 * 64 + 64 * HEAD_PAD) * 2
                        + (64 + 64 + HEAD_PAD) * 4),
    )

    cp_kwargs = dict(dimension_semantics=("parallel",))
    if bt > 2048:
        # Very large tiles can trip the scoped-VMEM default (16 MiB on v5e).
        cp_kwargs["vmem_limit_bytes"] = 64 * 1024 * 1024

    out = pl.pallas_call(
        fdi_kernel,
        out_shape=jax.ShapeDtypeStruct((b_pad, HEAD_PAD), jnp.float32),
        grid_spec=pltpu.PrefetchScalarGridSpec(
            num_scalar_prefetch=0,
            grid=(num_tiles,),
            in_specs=[
                pl.BlockSpec((bt, d_in), lambda i: (i, 0)),       # x tile (bf16)
                pl.BlockSpec((d_in, 64), const),                  # W1 (bf16)
                pl.BlockSpec((1, 64), const),                     # b1 (f32)
                pl.BlockSpec((64, 64), const),                    # W2 (bf16)
                pl.BlockSpec((1, 64), const),                     # b2 (f32)
                pl.BlockSpec((64, HEAD_PAD), const),              # fused head W (bf16)
                pl.BlockSpec((1, HEAD_PAD), const),               # fused head b (f32)
            ],
            out_specs=pl.BlockSpec((bt, HEAD_PAD), lambda i: (i, 0)),
        ),
        compiler_params=pltpu.CompilerParams(**cp_kwargs),
        cost_estimate=cost,
    )(x, w1, b1, w2, b2, wh, bh)

    fd = out[:B, 0:1]
    kp = out[:B, 1:4]
    return fd, kp


# ----------------------------------------------------------------------------
# Deterministic parameter init (mirrors torch.nn.init.orthogonal_ + zero bias)
# ----------------------------------------------------------------------------
def orthogonal_init(key, out_features, in_features, gain):
    """Returns a [out, in] orthogonal matrix scaled by `gain` (torch convention)."""
    rows, cols = out_features, in_features
    a = jax.random.normal(key, (max(rows, cols), min(rows, cols)), jnp.float32)
    q, r = jnp.linalg.qr(a)
    q = q * jnp.sign(jnp.diag(r))          # make decomposition unique
    if rows < cols:
        q = q.T
    return (gain * q[:rows, :cols]).astype(jnp.float32)


def make_fdi_params(key, obs_dim, act_dim):
    d_in = obs_dim + act_dim
    gain = math.sqrt(2.0)                  # layer_init default std
    k1, k2, k3, k4 = jax.random.split(key, 4)

    # PyTorch weights are [out, in]; kernel consumes [in, out] → transpose.
    w1 = orthogonal_init(k1, 64, d_in, gain).T            # [d_in, 64]
    b1 = jnp.zeros((1, 64), jnp.float32)
    w2 = orthogonal_init(k2, 64, 64, gain).T              # [64, 64]
    b2 = jnp.zeros((1, 64), jnp.float32)
    wfd = orthogonal_init(k3, 1, 64, gain).T              # [64, 1]
    wkp = orthogonal_init(k4, 3, 64, gain).T              # [64, 3]
    wh = jnp.concatenate([wfd, wkp], axis=1)              # [64, 4] fused heads
    wh = jnp.pad(wh, ((0, 0), (0, HEAD_PAD - 4)))         # lane-pad to [64, 128]
    bh = jnp.zeros((1, HEAD_PAD), jnp.float32)

    # Matmul operands stored bf16 (MXU-native); biases stay f32.
    return (w1.astype(jnp.bfloat16), b1,
            w2.astype(jnp.bfloat16), b2,
            wh.astype(jnp.bfloat16), bh)


# ----------------------------------------------------------------------------
# Pure-JAX f32 reference for verification (same numerical weights, f32 math)
# ----------------------------------------------------------------------------
def fdi_reference(state, action, params):
    (w1, b1, w2, b2, wh, bh) = params
    w1 = w1.astype(jnp.float32)
    w2 = w2.astype(jnp.float32)
    wh = wh.astype(jnp.float32)
    x = jnp.concatenate([state, action], axis=-1)
    h = jnp.tanh(x @ w1 + b1)
    h = jnp.tanh(h @ w2 + b2)
    heads = h @ wh + bh
    fd = heads[:, 0:1]                 # FD head: no activation
    kp = jnp.tanh(heads[:, 1:4])       # KParams head: tanh
    return fd, kp


if __name__ == "__main__":
    obs_dim, act_dim, batch = 8, 4, 8
    key = jax.random.PRNGKey(0)
    k_params, k_state, k_action = jax.random.split(key, 3)

    params = make_fdi_params(k_params, obs_dim, act_dim)
    state = jax.random.normal(k_state, (batch, obs_dim), jnp.float32)
    action = jax.random.normal(k_action, (batch, act_dim), jnp.float32)

    fd, kp = fdi_forward(state, action, params)
    fd = jax.block_until_ready(fd)
    kp = jax.block_until_ready(kp)

    fd_ref, kp_ref = fdi_reference(state, action, params)
    assert fd.shape == (batch, 1) and kp.shape == (batch, 3)
    # bf16 matmul operands → relaxed tolerance vs. f32 reference.
    assert jnp.allclose(fd, fd_ref, atol=5e-2, rtol=5e-2)
    assert jnp.allclose(kp, kp_ref, atol=5e-2, rtol=5e-2)

    print("KERNEL_OK")
</pallas_src>

<mosaic_0001>
module attributes {stable_mosaic.version = 11 : i64} {
  func.func @fdi_kernel(%arg0: i32, %arg1: memref<16x12xbf16, #tpu.memory_space<vmem>>, %arg2: memref<12x64xbf16, #tpu.memory_space<vmem>>, %arg3: memref<1x64xf32, #tpu.memory_space<vmem>>, %arg4: memref<64x64xbf16, #tpu.memory_space<vmem>>, %arg5: memref<1x64xf32, #tpu.memory_space<vmem>>, %arg6: memref<64x128xbf16, #tpu.memory_space<vmem>>, %arg7: memref<1x128xf32, #tpu.memory_space<vmem>>, %arg8: memref<16x128xf32, #tpu.memory_space<vmem>>) attributes {dimension_semantics = [#tpu.dimension_semantics<parallel>], iteration_bounds = array<i64: 1>, scalar_prefetch = 0 : i64, scratch_operands = 0 : i64, tpu.core_type = #tpu.core_type<tc>, window_params = [{transform_indices = @transform_0, window_bounds = array<i64: 16, 12>}, {pipeline_mode = #tpu.pipeline_mode<synchronous>, transform_indices = @transform_1, window_bounds = array<i64: 12, 64>}, {pipeline_mode = #tpu.pipeline_mode<synchronous>, transform_indices = @transform_2, window_bounds = array<i64: 1, 64>}, {pipeline_mode = #tpu.pipeline_mode<synchronous>, transform_indices = @transform_3, window_bounds = array<i64: 64, 64>}, {pipeline_mode = #tpu.pipeline_mode<synchronous>, transform_indices = @transform_4, window_bounds = array<i64: 1, 64>}, {pipeline_mode = #tpu.pipeline_mode<synchronous>, transform_indices = @transform_5, window_bounds = array<i64: 64, 128>}, {pipeline_mode = #tpu.pipeline_mode<synchronous>, transform_indices = @transform_6, window_bounds = array<i64: 1, 128>}, {transform_indices = @transform_7, window_bounds = array<i64: 16, 128>}]} {
    %c0 = arith.constant 0 : index
    %c0_0 = arith.constant 0 : index
    %0 = vector.load %arg1[%c0, %c0_0] : memref<16x12xbf16, #tpu.memory_space<vmem>>, vector<16x12xbf16>
    %c0_1 = arith.constant 0 : index
    %c0_2 = arith.constant 0 : index
    %1 = vector.load %arg2[%c0_1, %c0_2] : memref<12x64xbf16, #tpu.memory_space<vmem>>, vector<12x64xbf16>
    %cst = arith.constant dense<0.000000e+00> : vector<16x64xf32>
    %2 = tpu.matmul %0, %1, %cst {dimension_numbers = #tpu.dot_dimension_numbers<[1], [0], [0], [1], [0, 0, 1, 1], [], []>} : vector<16x12xbf16>, vector<12x64xbf16>, vector<16x64xf32> -> vector<16x64xf32>
    %c0_3 = arith.constant 0 : index
    %c0_4 = arith.constant 0 : index
    %3 = vector.load %arg3[%c0_3, %c0_4] : memref<1x64xf32, #tpu.memory_space<vmem>>, vector<1x64xf32>
    %4 = vector.broadcast %3 : vector<1x64xf32> to vector<16x64xf32>
    %5 = arith.addf %2, %4 : vector<16x64xf32>
    %6 = math.tanh %5 : vector<16x64xf32>
    %7 = arith.truncf %6 : vector<16x64xf32> to vector<16x64xbf16>
    %c0_5 = arith.constant 0 : index
    %c0_6 = arith.constant 0 : index
    %8 = vector.load %arg4[%c0_5, %c0_6] : memref<64x64xbf16, #tpu.memory_space<vmem>>, vector<64x64xbf16>
    %cst_7 = arith.constant dense<0.000000e+00> : vector<16x64xf32>
    %9 = tpu.matmul %7, %8, %cst_7 {dimension_numbers = #tpu.dot_dimension_numbers<[1], [0], [0], [1], [0, 0, 1, 1], [], []>} : vector<16x64xbf16>, vector<64x64xbf16>, vector<16x64xf32> -> vector<16x64xf32>
    %c0_8 = arith.constant 0 : index
    %c0_9 = arith.constant 0 : index
    %10 = vector.load %arg5[%c0_8, %c0_9] : memref<1x64xf32, #tpu.memory_space<vmem>>, vector<1x64xf32>
    %11 = vector.broadcast %10 : vector<1x64xf32> to vector<16x64xf32>
    %12 = arith.addf %9, %11 : vector<16x64xf32>
    %13 = math.tanh %12 : vector<16x64xf32>
    %14 = arith.truncf %13 : vector<16x64xf32> to vector<16x64xbf16>
    %c0_10 = arith.constant 0 : index
    %c0_11 = arith.constant 0 : index
    %15 = vector.load %arg6[%c0_10, %c0_11] : memref<64x128xbf16, #tpu.memory_space<vmem>>, vector<64x128xbf16>
    %cst_12 = arith.constant dense<0.000000e+00> : vector<16x128xf32>
    %16 = tpu.matmul %14, %15, %cst_12 {dimension_numbers = #tpu.dot_dimension_numbers<[1], [0], [0], [1], [0, 0, 1, 1], [], []>} : vector<16x64xbf16>, vector<64x128xbf16>, vector<16x128xf32> -> vector<16x128xf32>
    %c0_13 = arith.constant 0 : index
    %c0_14 = arith.constant 0 : index
    %17 = vector.load %arg7[%c0_13, %c0_14] : memref<1x128xf32, #tpu.memory_space<vmem>>, vector<1x128xf32>
    %18 = vector.broadcast %17 : vector<1x128xf32> to vector<16x128xf32>
    %19 = arith.addf %16, %18 : vector<16x128xf32>
    %20 = tpu.iota {dimensions = array<i32: 1>} : vector<16x128xi32>
    %c0_i32 = arith.constant 0 : i32
    %21 = vector.broadcast %c0_i32 : i32 to vector<16x128xi32>
    %22 = arith.cmpi eq, %20, %21 : vector<16x128xi32>
    %23 = math.tanh %19 : vector<16x128xf32>
    %24 = arith.select %22, %19, %23 : vector<16x128xi1>, vector<16x128xf32>
    %c0_15 = arith.constant 0 : index
    %c0_16 = arith.constant 0 : index
    %25 = vector.load %arg8[%c0_15, %c0_16] : memref<16x128xf32, #tpu.memory_space<vmem>>, vector<16x128xf32>
    tpu.vector_store %arg8[%c0_15, %c0_16], %24 {strides = array<i32>} : memref<16x128xf32, #tpu.memory_space<vmem>>, vector<16x128xf32>,
    return
  }
  func.func @transform_0(%arg0: i32) -> (i32, i32) {
    %c0_i32 = arith.constant 0 : i32
    %c0_i32_0 = arith.constant 0 : i32
    return %arg0, %c0_i32 : i32, i32
  }
  func.func @transform_1(%arg0: i32) -> (i32, i32) {
    %c0_i32 = arith.constant 0 : i32
    %c0_i32_0 = arith.constant 0 : i32
    %c0_i32_1 = arith.constant 0 : i32
    return %c0_i32, %c0_i32_0 : i32, i32
  }
  func.func @transform_2(%arg0: i32) -> (i32, i32) {
    %c0_i32 = arith.constant 0 : i32
    %c0_i32_0 = arith.constant 0 : i32
    %c0_i32_1 = arith.constant 0 : i32
    return %c0_i32, %c0_i32_0 : i32, i32
  }
  func.func @transform_3(%arg0: i32) -> (i32, i32) {
    %c0_i32 = arith.constant 0 : i32
    %c0_i32_0 = arith.constant 0 : i32
    %c0_i32_1 = arith.constant 0 : i32
    return %c0_i32, %c0_i32_0 : i32, i32
  }
  func.func @transform_4(%arg0: i32) -> (i32, i32) {
    %c0_i32 = arith.constant 0 : i32
    %c0_i32_0 = arith.constant 0 : i32
    %c0_i32_1 = arith.constant 0 : i32
    return %c0_i32, %c0_i32_0 : i32, i32
  }
  func.func @transform_5(%arg0: i32) -> (i32, i32) {
    %c0_i32 = arith.constant 0 : i32
    %c0_i32_0 = arith.constant 0 : i32
    %c0_i32_1 = arith.constant 0 : i32
    return %c0_i32, %c0_i32_0 : i32, i32
  }
  func.func @transform_6(%arg0: i32) -> (i32, i32) {
    %c0_i32 = arith.constant 0 : i32
    %c0_i32_0 = arith.constant 0 : i32
    %c0_i32_1 = arith.constant 0 : i32
    return %c0_i32, %c0_i32_0 : i32, i32
  }
  func.func @transform_7(%arg0: i32) -> (i32, i32) {
    %c0_i32 = arith.constant 0 : i32
    %c0_i32_0 = arith.constant 0 : i32
    return %arg0, %c0_i32 : i32, i32
  }
}

</mosaic_0001>

<llo_original>
// kernel: tpu_custom_call.1
$region0: #{tpu_custom_call.1}
  #allocation0 [shape = 'u32[]', space=smem, size = 0x4, offset = 0x4, fixed_abs, tag = 'smem constant byte address 0x4 - core index']
  #allocation1 [shape = 'u32[144,128]{1,0:T(1,128)}', space=vmem, size = 0x12000, scoped, tag = 'internal scratch']
  %s0 = inlined_call_operand.hbm [shape: bf16[16,12], index: 0, kind: input, shape index: {}]
  %s1 = inlined_call_operand.hbm [shape: bf16[12,64], index: 1, kind: input, shape index: {}]
  %s2 = inlined_call_operand.vmem [shape: f32[1,64], index: 2, kind: input, shape index: {}]
  %s3 = inlined_call_operand.hbm [shape: bf16[64,64], index: 3, kind: input, shape index: {}]
  %s4 = inlined_call_operand.vmem [shape: f32[1,64], index: 4, kind: input, shape index: {}]
  %s5 = inlined_call_operand.hbm [shape: bf16[64,128], index: 5, kind: input, shape index: {}]
  %s6 = inlined_call_operand.vmem [shape: f32[1,128], index: 6, kind: input, shape index: {}]
  %s7 = inlined_call_operand.hbm [shape: f32[16,128], index: 7, kind: output, shape index: {}]
  %s8 = sld [smem:[#allocation0]]
  $region54: #{tpu_custom_call.1} parent=0
    _
  %s10 = ssub.s32 1, %s8
  %s11 = scalar_select 0, %s10, %s8
  $region1: #{tpu_custom_call.1} parent=0
    #allocation2 [shape = 'u8[4096]{0}', space=vmem, size = 0x1000, scoped, tag = 'input window, operand 0, single buffered']
    #allocation3 [shape = 's32[1]{0}', space=sflag, size = 0x4, scoped, tag = 'scoped memory for tpu_custom_call.1']
    #allocation4 [shape = 's32[1]{0}', space=sflag, size = 0x4, scoped, tag = 'scoped memory for tpu_custom_call.1']
    #allocation5 [shape = 'u8[4096]{0}', space=vmem, size = 0x1000, scoped, tag = 'input window, operand 1, single buffered']
    #allocation6 [shape = 's32[1]{0}', space=sflag, size = 0x4, scoped, tag = 'scoped memory for tpu_custom_call.1']
    #allocation7 [shape = 'u8[16384]{0}', space=vmem, size = 0x4000, scoped, tag = 'input window, operand 3, single buffered']
    #allocation8 [shape = 'u8[16384]{0}', space=vmem, size = 0x4000, scoped, tag = 'input window, operand 5, single buffered']
    #allocation9 [shape = 's32[1]{0}', space=sflag, size = 0x4, scoped, tag = 'scoped memory for tpu_custom_call.1']
    #allocation10 [shape = 'u8[8192]{0}', space=vmem, size = 0x2000, scoped, tag = 'output window, operand 0, single buffered']
    %12 = vsyncpa [#allocation3], 0
    %13 = vsyncpa [#allocation6], 0
    %14 = vsyncpa [#allocation9], 0
    %15 = vsyncpa [#allocation4], 0
    // Predicated region
    $region2: #{tpu_custom_call.1} parent=1 // pred_check
      _
    $region3: #{tpu_custom_call.1} parent=1 // pred_check_branch
      %17 = sbr.rel (0) target = $region5
    $region4: #{tpu_custom_call.1} parent=1 // pred_region
      %s19 = ssub.s32 128, 128
      %20 = vsyncadd [#allocation3], %s19
      %s21 = sshll.u32 [#allocation2], 4
      %s22 = int_to_ptr.vmem [resolvable:$true] %s21
      %27 = dma.hbm_to_vmem [thread:$0]  %s0, 128, %s22, [#allocation3], 64, 64, 4
    $region5: #{tpu_custom_call.1} parent=1 // pred_fallthru
      _
    // Predicated region
    $region6: #{tpu_custom_call.1} parent=1 // pred_check
      _
    $region7: #{tpu_custom_call.1} parent=1 // pred_check_branch
      %29 = sbr.rel (0) target = $region9
    $region8: #{tpu_custom_call.1} parent=1 // pred_region
      %s31 = ssub.s32 128, 128
      %32 = vsyncadd [#allocation6], %s31
      %s33 = sshll.u32 [#allocation5], 4
      %s34 = int_to_ptr.vmem [resolvable:$true] %s33
      %39 = dma.hbm_to_vmem [thread:$0]  %s1, 128, %s34, [#allocation6], 64, 64, 4
    $region9: #{tpu_custom_call.1} parent=1 // pred_fallthru
      _
    // Predicated region
    $region10: #{tpu_custom_call.1} parent=1 // pred_check
      _
    $region11: #{tpu_custom_call.1} parent=1 // pred_check_branch
      %41 = sbr.rel (0) target = $region13
    $region12: #{tpu_custom_call.1} parent=1 // pred_region
      _
    $region13: #{tpu_custom_call.1} parent=1 // pred_fallthru
      _
    // Predicated region
    $region14: #{tpu_custom_call.1} parent=1 // pred_check
      _
    $region15: #{tpu_custom_call.1} parent=1 // pred_check_branch
      %43 = sbr.rel (0) target = $region17
    $region16: #{tpu_custom_call.1} parent=1 // pred_region
      %s45 = ssub.s32 512, 512
      %46 = vsyncadd [#allocation6], %s45
      %s47 = sshll.u32 [#allocation7], 4
      %s48 = int_to_ptr.vmem [resolvable:$true] %s47
      %53 = dma.hbm_to_vmem [thread:$0]  %s3, 512, %s48, [#allocation6], 64, 64, 4
    $region17: #{tpu_custom_call.1} parent=1 // pred_fallthru
      _
    // Predicated region
    $region18: #{tpu_custom_call.1} parent=1 // pred_check
      _
    $region19: #{tpu_custom_call.1} parent=1 // pred_check_branch
      %55 = sbr.rel (0) target = $region21
    $region20: #{tpu_custom_call.1} parent=1 // pred_region
      _
    $region21: #{tpu_custom_call.1} parent=1 // pred_fallthru
      _
    // Predicated region
    $region22: #{tpu_custom_call.1} parent=1 // pred_check
      _
    $region23: #{tpu_custom_call.1} parent=1 // pred_check_branch
      %57 = sbr.rel (0) target = $region25
    $region24: #{tpu_custom_call.1} parent=1 // pred_region
      %s59 = ssub.s32 512, 512
      %60 = vsyncadd [#allocation9], %s59
      %s61 = sshll.u32 [#allocation8], 4
      %s62 = int_to_ptr.vmem [resolvable:$true] %s61
      %67 = dma.hbm_to_vmem [thread:$0]  %s5, 512, %s62, [#allocation9], 64, 64, 4
    $region25: #{tpu_custom_call.1} parent=1 // pred_fallthru
      _
    // Predicated region
    $region26: #{tpu_custom_call.1} parent=1 // pred_check
      _
    $region27: #{tpu_custom_call.1} parent=1 // pred_check_branch
      %69 = sbr.rel (0) target = $region29
    $region28: #{tpu_custom_call.1} parent=1 // pred_region
      _
    $region29: #{tpu_custom_call.1} parent=1 // pred_fallthru
      _
    // Predicated region
    $region30: #{tpu_custom_call.1} parent=1 // pred_check
      _
    $region31: #{tpu_custom_call.1} parent=1 // pred_check_branch
      %71 = sbr.rel (0) target = $region33
    $region32: #{tpu_custom_call.1} parent=1 // pred_region
      %72 = dma.done [#allocation3], 128
    $region33: #{tpu_custom_call.1} parent=1 // pred_fallthru
      _
    // Predicated region
    $region34: #{tpu_custom_call.1} parent=1 // pred_check
      _
    $region35: #{tpu_custom_call.1} parent=1 // pred_check_branch
      %74 = sbr.rel (0) target = $region37
    $region36: #{tpu_custom_call.1} parent=1 // pred_region
      %75 = dma.done [#allocation6], 128
    $region37: #{tpu_custom_call.1} parent=1 // pred_fallthru
      _
    // Predicated region
    $region38: #{tpu_custom_call.1} parent=1 // pred_check
      _
    $region39: #{tpu_custom_call.1} parent=1 // pred_check_branch
      %77 = sbr.rel (0) target = $region41
    $region40: #{tpu_custom_call.1} parent=1 // pred_region
      %78 = dma.done [#allocation6], 512
    $region41: #{tpu_custom_call.1} parent=1 // pred_fallthru
      _
    // Predicated region
    $region42: #{tpu_custom_call.1} parent=1 // pred_check
      _
    $region43: #{tpu_custom_call.1} parent=1 // pred_check_branch
      %80 = sbr.rel (0) target = $region45
    $region44: #{tpu_custom_call.1} parent=1 // pred_region
      %81 = dma.done [#allocation9], 512
    $region45: #{tpu_custom_call.1} parent=1 // pred_fallthru
      _
    %v83 = vld [vmem:[#allocation2] sm:$0xf]
    %v84 = vld [vmem:[#allocation2 + $0x4] sm:$0xf]
    %v85 = vld [vmem:[#allocation5] sm:$0xf]
    %v86 = vld [vmem:[#allocation5 + $0x4] sm:$0x3]
    %v87 = vld [vmem:[%s2] sm:$0x1]
    %v89 = vlaneseq
    %v90 = vshrl.u32 %v89, 7
    %v91 = vsub.s32 0, %v90
    %v92 = vrot.slane %v87, %v91
    %v96 = vunpack.c.l.b16 %v83
    %v97 = vunpack.c.l.b16 %v84
    %v98 = vpack.c.b16 %v97, %v96
    %v101 = vunpack.c.l.b16 %v85
    %v102 = vunpack.c.l.b16 %v86
    %v103 = vpack.c.b16 %v102, %v101
    %vm104 = vcmask 97280
    %v106 = vsel %vm104, %v98, 0
    %vm108 = vcmask 1045504
    %v110 = vsel %vm108, %v103, 0
    %112 = vmatprep.subr.bf16.mxu0 0
    %113 = vmatpush1.bf16.msra.mxu0 %v110
    %114 = vmatprep.subr.bf16.mxu0 0
    %115 = vmatpush1.bf16.msra.mxu0 0
    %116 = vmatprep.subr.bf16.mxu0 0
    %117 = vmatpush1.bf16.msra.mxu0 0
    %118 = vmatprep.subr.bf16.mxu0 0
    %119 = vmatpush1.bf16.msra.mxu0 0
    %120 = vmatprep.subr.bf16.mxu0 0
    %121 = vmatpush1.bf16.msra.mxu0 0
    %122 = vmatprep.subr.bf16.mxu0 0
    %123 = vmatpush1.bf16.msra.mxu0 0
    %124 = vmatprep.subr.bf16.mxu0 0
    %125 = vmatpush1.bf16.msra.mxu0 0
    %126 = vmatprep.subr.bf16.mxu0 0
    %127 = vmatpush1.bf16.msra.mxu0 0
    %128 = vmatprep.subr.bf16.mxu0 0
    %129 = vmatpush1.bf16.msra.mxu0 0
    %130 = vmatprep.subr.bf16.mxu0 0
    %131 = vmatpush1.bf16.msra.mxu0 0
    %132 = vmatprep.subr.bf16.mxu0 0
    %133 = vmatpush1.bf16.msra.mxu0 0
    %134 = vmatprep.subr.bf16.mxu0 0
    %135 = vmatpush1.bf16.msra.mxu0 0
    %136 = vmatprep.subr.bf16.mxu0 0
    %137 = vmatpush1.bf16.msra.mxu0 0
    %138 = vmatprep.subr.bf16.mxu0 0
    %139 = vmatpush1.bf16.msra.mxu0 0
    %140 = vmatprep.subr.bf16.mxu0 0
    %141 = vmatpush1.bf16.msra.mxu0 0
    %142 = vmatprep.subr.bf16.mxu0 0
    %143 = vmatpush1.bf16.msra.mxu0 0
    %144 = vmatprep.mubr.bf16.mxu0 0
    %145 = vmatmul.mubr.bf16.gmra.mrb[0].mxu0 %v106
    %v146 = vpop.f32.mrb[0].mxu0
    %v147 = vadd.f32 %v92, %v146
    %v148 = vpop.f32.mrb[0].mxu0
    %v149 = vpop.f32.mrb[0].mxu0
    %v150 = vadd.f32 %v92, %v149
    %v151 = vpop.f32.mrb[0].mxu0
    %152 = vdwg.mxu0
    %v153 = vtanh.pop %v147
    %v154 = vtanh.pop %v150
    %v155 = vpack.c.bf16 %v154, %v153
    %v156 = vld [vmem:[#allocation7] sm:$0xf]
    %v157 = vld [vmem:[#allocation7 + $0x4] sm:$0xf]
    %v158 = vld [vmem:[#allocation7 + $0x8] sm:$0xf]
    %v159 = vld [vmem:[#allocation7 + $0xc] sm:$0xf]
    %v160 = vld [vmem:[#allocation7 + $0x10] sm:$0xf]
    %v161 = vld [vmem:[#allocation7 + $0x14] sm:$0xf]
    %v162 = vld [vmem:[#allocation7 + $0x18] sm:$0xf]
    %v163 = vld [vmem:[#allocation7 + $0x1c] sm:$0xf]
    %v164 = vld [vmem:[%s4] sm:$0x1]
    %v166 = vlaneseq
    %v167 = vshrl.u32 %v166, 7
    %v168 = vsub.s32 0, %v167
    %v169 = vrot.slane %v164, %v168
    %v179 = vunpack.c.l.b16 %v156
    %v180 = vunpack.c.l.b16 %v157
    %v181 = vunpack.c.l.b16 %v158
    %v182 = vunpack.c.l.b16 %v159
    %v183 = vunpack.c.l.b16 %v160
    %v184 = vunpack.c.l.b16 %v161
    %v185 = vunpack.c.l.b16 %v162
    %v186 = vunpack.c.l.b16 %v163
    %v187 = vpack.c.b16 %v180, %v179
    %v188 = vpack.c.b16 %v182, %v181
    %v189 = vpack.c.b16 %v184, %v183
    %v190 = vpack.c.b16 %v186, %v185
    %vm195 = vcmask 523264
    %v197 = vsel %vm195, %v155, 0
    %199 = vmatprep.subr.bf16.mxu0 0
    %200 = vmatpush1.bf16.msra.mxu0 %v187
    %201 = vmatprep.subr.bf16.mxu0 0
    %202 = vmatpush1.bf16.msra.mxu0 %v188
    %203 = vmatprep.subr.bf16.mxu0 0
    %204 = vmatpush1.bf16.msra.mxu0 %v189
    %205 = vmatprep.subr.bf16.mxu0 0
    %206 = vmatpush1.bf16.msra.mxu0 %v190
    %207 = vmatprep.subr.bf16.mxu0 0
    %208 = vmatpush1.bf16.msra.mxu0 0
    %209 = vmatprep.subr.bf16.mxu0 0
    %210 = vmatpush1.bf16.msra.mxu0 0
    %211 = vmatprep.subr.bf16.mxu0 0
    %212 = vmatpush1.bf16.msra.mxu0 0
    %213 = vmatprep.subr.bf16.mxu0 0
    %214 = vmatpush1.bf16.msra.mxu0 0
    %215 = vmatprep.subr.bf16.mxu0 0
    %216 = vmatpush1.bf16.msra.mxu0 0
    %217 = vmatprep.subr.bf16.mxu0 0
    %218 = vmatpush1.bf16.msra.mxu0 0
    %219 = vmatprep.subr.bf16.mxu0 0
    %220 = vmatpush1.bf16.msra.mxu0 0
    %221 = vmatprep.subr.bf16.mxu0 0
    %222 = vmatpush1.bf16.msra.mxu0 0
    %223 = vmatprep.subr.bf16.mxu0 0
    %224 = vmatpush1.bf16.msra.mxu0 0
    %225 = vmatprep.subr.bf16.mxu0 0
    %226 = vmatpush1.bf16.msra.mxu0 0
    %227 = vmatprep.subr.bf16.mxu0 0
    %228 = vmatpush1.bf16.msra.mxu0 0
    %229 = vmatprep.subr.bf16.mxu0 0
    %230 = vmatpush1.bf16.msra.mxu0 0
    %231 = vmatprep.mubr.bf16.mxu0 0
    %232 = vmatmul.mubr.bf16.gmra.mrb[0].mxu0 %v197
    %v233 = vpop.f32.mrb[0].mxu0
    %v234 = vadd.f32 %v169, %v233
    %v235 = vpop.f32.mrb[0].mxu0
    %v236 = vpop.f32.mrb[0].mxu0
    %v237 = vadd.f32 %v169, %v236
    %v238 = vpop.f32.mrb[0].mxu0
    %239 = vdwg.mxu0
    %v240 = vtanh.pop %v234
    %v241 = vtanh.pop %v237
    %v242 = vpack.c.bf16 %v241, %v240
    %v243 = vld [vmem:[#allocation8] sm:$0xf]
    %v244 = vld [vmem:[#allocation8 + $0x4] sm:$0xf]
    %v245 = vld [vmem:[#allocation8 + $0x8] sm:$0xf]
    %v246 = vld [vmem:[#allocation8 + $0xc] sm:$0xf]
    %v247 = vld [vmem:[#allocation8 + $0x10] sm:$0xf]
    %v248 = vld [vmem:[#allocation8 + $0x14] sm:$0xf]
    %v249 = vld [vmem:[#allocation8 + $0x18] sm:$0xf]
    %v250 = vld [vmem:[#allocation8 + $0x1c] sm:$0xf]
    %v251 = vld [vmem:[%s6] sm:$0x1]
    %v253 = vlaneseq
    %v254 = vshrl.u32 %v253, 7
    %v255 = vsub.s32 0, %v254
    %v256 = vrot.slane %v251, %v255
    %v266 = vunpack.c.l.b16 %v243
    %v267 = vunpack.c.l.b16 %v244
    %v268 = vunpack.c.l.b16 %v245
    %v269 = vunpack.c.l.b16 %v246
    %v270 = vunpack.c.l.b16 %v247
    %v271 = vunpack.c.l.b16 %v248
    %v272 = vunpack.c.l.b16 %v249
    %v273 = vunpack.c.l.b16 %v250
    %v274 = vpack.c.b16 %v267, %v266
    %v275 = vpack.c.b16 %v269, %v268
    %v276 = vpack.c.b16 %v271, %v270
    %v277 = vpack.c.b16 %v273, %v272
    %v283 = vsel %vm195, %v242, 0
    %285 = vmatprep.subr.bf16.mxu0 0
    %286 = vmatpush1.bf16.msra.mxu0 %v274
    %287 = vmatprep.subr.bf16.mxu0 0
    %288 = vmatpush1.bf16.msra.mxu0 %v275
    %289 = vmatprep.subr.bf16.mxu0 0
    %290 = vmatpush1.bf16.msra.mxu0 %v276
    %291 = vmatprep.subr.bf16.mxu0 0
    %292 = vmatpush1.bf16.msra.mxu0 %v277
    %293 = vmatprep.subr.bf16.mxu0 0
    %294 = vmatpush1.bf16.msra.mxu0 0
    %295 = vmatprep.subr.bf16.mxu0 0
    %296 = vmatpush1.bf16.msra.mxu0 0
    %297 = vmatprep.subr.bf16.mxu0 0
    %298 = vmatpush1.bf16.msra.mxu0 0
    %299 = vmatprep.subr.bf16.mxu0 0
    %300 = vmatpush1.bf16.msra.mxu0 0
    %301 = vmatprep.subr.bf16.mxu0 0
    %302 = vmatpush1.bf16.msra.mxu0 0
    %303 = vmatprep.subr.bf16.mxu0 0
    %304 = vmatpush1.bf16.msra.mxu0 0
    %305 = vmatprep.subr.bf16.mxu0 0
    %306 = vmatpush1.bf16.msra.mxu0 0
    %307 = vmatprep.subr.bf16.mxu0 0
    %308 = vmatpush1.bf16.msra.mxu0 0
    %309 = vmatprep.subr.bf16.mxu0 0
    %310 = vmatpush1.bf16.msra.mxu0 0
    %311 = vmatprep.subr.bf16.mxu0 0
    %312 = vmatpush1.bf16.msra.mxu0 0
    %313 = vmatprep.subr.bf16.mxu0 0
    %314 = vmatpush1.bf16.msra.mxu0 0
    %315 = vmatprep.subr.bf16.mxu0 0
    %316 = vmatpush1.bf16.msra.mxu0 0
    %317 = vmatprep.mubr.bf16.mxu0 0
    %318 = vmatmul.mubr.bf16.gmra.mrb[0].mxu0 %v283
    %v319 = vpop.f32.mrb[0].mxu0
    %v320 = vadd.f32 %v256, %v319
    %v321 = vpop.f32.mrb[0].mxu0
    %v322 = vpop.f32.mrb[0].mxu0
    %v323 = vadd.f32 %v256, %v322
    %v324 = vpop.f32.mrb[0].mxu0
    %325 = vdwg.mxu0
    %v326 = vlaneseq
    %v327 = vand.u32 %v326, 127
    %vm328 = vcmp.eq.s32.totalorder %v327, 0
    %v329 = vtanh.pop %v320
    %v330 = vtanh.pop %v323
    %v331 = vsel %vm328, %v320, %v329
    %v332 = vsel %vm328, %v323, %v330
    %333 = vst [vmem:[#allocation10] sm:$0xff] %v331
    %334 = vst [vmem:[#allocation10 + $0x8] sm:$0xff] %v332
    // Predicated region
    $region46: #{tpu_custom_call.1} parent=1 // pred_check
      _
    $region47: #{tpu_custom_call.1} parent=1 // pred_check_branch
      %336 = sbr.rel (0) target = $region49
    $region48: #{tpu_custom_call.1} parent=1 // pred_region
      %s338 = ssub.s32 256, 256
      %339 = vsyncadd [#allocation4], %s338
      %s340 = sshll.u32 [#allocation10], 4
      %s341 = int_to_ptr.vmem [resolvable:$true] %s340
      %346 = dma.vmem_to_hbm [thread:$0]  %s341, 256, %s7, [#allocation4], 128, 128, 8
    $region49: #{tpu_custom_call.1} parent=1 // pred_fallthru
      _
    // Predicated region
    $region50: #{tpu_custom_call.1} parent=1 // pred_check
      _
    $region51: #{tpu_custom_call.1} parent=1 // pred_check_branch
      %348 = sbr.rel (0) target = $region53
    $region52: #{tpu_custom_call.1} parent=1 // pred_region
      %349 = dma.done [#allocation4], 256
    $region53: #{tpu_custom_call.1} parent=1 // pred_fallthru
      _
    %350 = vsyncpa [#allocation3], 1
    %351 = vsyncpa [#allocation6], 1
    %352 = vsyncpa [#allocation9], 1
    %353 = vsyncpa [#allocation4], 1

</llo_original>
